<compile_context>
chip_gen: v5e
topology: v5e:2x2
jax: 0.10.0
libtpu: 0.0.40
codegen_flags: <defaults>
</compile_context>

<pallas_src>
import functools

import jax
import jax.numpy as jnp
from jax.experimental import pallas as pl
from jax.experimental.pallas import tpu as pltpu


def _linear_kernel(x_ref, w_ref, b_ref, o_ref, *, apply_relu):
    """One (tm, tn) output tile of relu?(x @ w + b); full K in a single MXU pass."""
    out = jnp.dot(x_ref[...], w_ref[...], preferred_element_type=jnp.float32)
    out = out + b_ref[...].astype(jnp.float32)            # (1, tn) broadcasts over rows
    if apply_relu:
        out = jnp.maximum(out, 0.0)
    o_ref[...] = out.astype(o_ref.dtype)


def _pick_tn(N, K, itemsize, *, tn_target=1024, max_weight_block_bytes=8 << 20):
    """Largest multiple-of-128 divisor of N that (a) keeps the (K, tn) weight block
    <= ~8 MiB (so double-buffering fits every generation incl. v7x's 64 MiB VMEM) and
    (b) leaves >= 2 N blocks when possible (work for both v7x TensorCores)."""
    if N % 128 != 0:
        return N                       # block must then equal the full dim
    cap = max(128, (max_weight_block_bytes // (K * itemsize)) // 128 * 128)
    target = min(tn_target, cap)
    if N >= 256:
        target = min(target, N // 2)   # prefer >= 2 lane-dense N blocks
    target = max(target, 128)
    best = 128
    t = 128
    while t <= target:
        if N % t == 0:
            best = t
        t += 128
    return best


def pallas_linear(x, w, b, *, apply_relu, out_dtype=None, tm_target=256):
    """y = relu?(x @ w + b) with x:[M,K], w:[K,N] (already transposed), b:[N].

    Weight-HBM-bandwidth-bound regime (tiny batch): the K axis is not tiled, weights
    are streamed in fat lane-dense (K, tn) blocks, the activation block stays resident
    in VMEM across the N axis, and the epilogue runs once in f32 before the store.
    """
    M, K = x.shape
    K2, N = w.shape
    assert K == K2 and b.shape == (N,)
    out_dtype = out_dtype or x.dtype

    # M tiling: whole (small) batch in one block -> every weight block is DMA'd from
    # HBM exactly once. Pad + tile only for genuinely large batches.
    if M <= 2 * tm_target:
        tm, m_pad = M, 0
    else:
        tm = tm_target
        m_pad = (-M) % tm
    x_p = jnp.pad(x, ((0, m_pad), (0, 0))) if m_pad else x
    Mp = M + m_pad

    tn = _pick_tn(N, K, jnp.dtype(w.dtype).itemsize)
    grid = (Mp // tm, N // tn)                    # K axis collapsed (tk == K)
    bias2d = b.astype(jnp.float32).reshape(1, N)

    m_blocks = Mp // tm
    cost = pl.CostEstimate(
        flops=2 * Mp * N * K,
        transcendentals=0,
        bytes_accessed=(Mp * K * x_p.dtype.itemsize            # x: once per M block
                        + K * N * w.dtype.itemsize * m_blocks  # W: re-streamed per M block
                        + N * 4 * m_blocks                     # bias
                        + Mp * N * jnp.dtype(out_dtype).itemsize),
    )

    kernel = functools.partial(_linear_kernel, apply_relu=apply_relu)
    out = pl.pallas_call(
        kernel,
        out_shape=jax.ShapeDtypeStruct((Mp, N), out_dtype),
        grid_spec=pltpu.PrefetchScalarGridSpec(
            num_scalar_prefetch=0,
            grid=grid,
            in_specs=[
                pl.BlockSpec((tm, K), lambda i, j: (i, 0)),   # activation, resident over j
                pl.BlockSpec((K, tn), lambda i, j: (0, j)),   # streamed weight block
                pl.BlockSpec((1, tn), lambda i, j: (0, j)),   # f32 bias slice
            ],
            out_specs=pl.BlockSpec((tm, tn), lambda i, j: (i, j)),
        ),
        compiler_params=pltpu.CompilerParams(
            dimension_semantics=("parallel", "parallel"),
            vmem_limit_bytes=48 * 1024 * 1024,
        ),
        cost_estimate=cost,
    )(x_p, w, bias2d)
    return out[:M] if m_pad else out


def init_params(key, input_size, hidden_size, output_size, dtype=jnp.float32):
    """Deterministic Kaiming-uniform-ish init (nn.Linear shapes, stored transposed [K,N])."""
    sizes = [
        (input_size, hidden_size),
        (hidden_size, hidden_size),
        (hidden_size, hidden_size),
        (hidden_size, output_size),
    ]
    params = []
    for fan_in, fan_out in sizes:
        key, kw, kb = jax.random.split(key, 3)
        bound = 1.0 / jnp.sqrt(fan_in)
        w = jax.random.uniform(kw, (fan_in, fan_out), dtype, -bound, bound)
        b = jax.random.uniform(kb, (fan_out,), dtype, -bound, bound)
        params.append((w, b))
    return params


def simple_model_forward(x, params, compute_dtype=jnp.bfloat16):
    """Sequential(Linear, ReLU, Linear, ReLU, Linear, ReLU, Linear)."""
    n = len(params)
    h = x.astype(compute_dtype)
    for idx, (w, b) in enumerate(params):
        h = pallas_linear(
            h, w.astype(compute_dtype), b.astype(jnp.float32),
            apply_relu=(idx < n - 1), out_dtype=compute_dtype,
        )
    return h


def reference_forward(x, params, compute_dtype=jnp.float32):
    """Plain-JAX reference mirroring the kernel's dtype/rounding points."""
    n = len(params)
    h = x.astype(compute_dtype)
    for idx, (w, b) in enumerate(params):
        h = jnp.dot(h, w.astype(compute_dtype), preferred_element_type=jnp.float32)
        h = h + b.astype(jnp.float32)
        if idx < n - 1:
            h = jnp.maximum(h, 0.0)
        h = h.astype(compute_dtype)
    return h


if __name__ == "__main__":
    # Small, structurally consistent shapes (the real module is 1024 / 4096 / 1024).
    batch, input_size, hidden_size, output_size = 8, 128, 256, 128

    key = jax.random.PRNGKey(0)
    key, kx = jax.random.split(key)
    x = jax.random.normal(kx, (batch, input_size), jnp.float32)
    params = init_params(key, input_size, hidden_size, output_size)

    # fp32 path: check against a plain-JAX reference.
    y32 = jax.block_until_ready(simple_model_forward(x, params, jnp.float32))
    y32_ref = reference_forward(x, params, jnp.float32)
    assert y32.shape == (batch, output_size)
    assert jnp.allclose(y32, y32_ref, atol=2e-3, rtol=2e-3)

    # bf16 path (default for performance): compare against a bf16 reference.
    y16 = jax.block_until_ready(simple_model_forward(x, params, jnp.bfloat16))
    y16_ref = reference_forward(x, params, jnp.bfloat16)
    assert y16.shape == (batch, output_size)
    assert jnp.allclose(y16.astype(jnp.float32), y16_ref.astype(jnp.float32),
                        atol=5e-2, rtol=5e-2)

    print("KERNEL_OK")
</pallas_src>

<mosaic_0001>
module attributes {stable_mosaic.version = 11 : i64} {
  func.func @_linear_kernel(%arg0: i32, %arg1: i32, %arg2: memref<8x128xf32, #tpu.memory_space<vmem>>, %arg3: memref<128x128xf32, #tpu.memory_space<vmem>>, %arg4: memref<1x128xf32, #tpu.memory_space<vmem>>, %arg5: memref<8x128xf32, #tpu.memory_space<vmem>>) attributes {dimension_semantics = [#tpu.dimension_semantics<parallel>, #tpu.dimension_semantics<parallel>], iteration_bounds = array<i64: 1, 2>, scalar_prefetch = 0 : i64, scratch_operands = 0 : i64, tpu.core_type = #tpu.core_type<tc>, window_params = [{transform_indices = @transform_0, window_bounds = array<i64: 8, 128>}, {transform_indices = @transform_1, window_bounds = array<i64: 128, 128>}, {transform_indices = @transform_2, window_bounds = array<i64: 1, 128>}, {transform_indices = @transform_3, window_bounds = array<i64: 8, 128>}]} {
    %c0 = arith.constant 0 : index
    %c0_0 = arith.constant 0 : index
    %0 = vector.load %arg2[%c0, %c0_0] : memref<8x128xf32, #tpu.memory_space<vmem>>, vector<8x128xf32>
    %c0_1 = arith.constant 0 : index
    %c0_2 = arith.constant 0 : index
    %1 = vector.load %arg3[%c0_1, %c0_2] : memref<128x128xf32, #tpu.memory_space<vmem>>, vector<128x128xf32>
    %cst = arith.constant dense<0.000000e+00> : vector<8x128xf32>
    %2 = tpu.matmul %0, %1, %cst {dimension_numbers = #tpu.dot_dimension_numbers<[1], [0], [0], [1], [0, 0, 1, 1], [], []>} : vector<8x128xf32>, vector<128x128xf32>, vector<8x128xf32> -> vector<8x128xf32>
    %c0_3 = arith.constant 0 : index
    %c0_4 = arith.constant 0 : index
    %3 = vector.load %arg4[%c0_3, %c0_4] : memref<1x128xf32, #tpu.memory_space<vmem>>, vector<1x128xf32>
    %4 = vector.broadcast %3 : vector<1x128xf32> to vector<8x128xf32>
    %5 = arith.addf %2, %4 : vector<8x128xf32>
    %cst_5 = arith.constant 0.000000e+00 : f32
    %6 = vector.broadcast %cst_5 : f32 to vector<8x128xf32>
    %7 = arith.maximumf %5, %6 : vector<8x128xf32>
    %c0_6 = arith.constant 0 : index
    %c0_7 = arith.constant 0 : index
    %8 = vector.load %arg5[%c0_6, %c0_7] : memref<8x128xf32, #tpu.memory_space<vmem>>, vector<8x128xf32>
    tpu.vector_store %arg5[%c0_6, %c0_7], %7 {strides = array<i32>} : memref<8x128xf32, #tpu.memory_space<vmem>>, vector<8x128xf32>,
    return
  }
  func.func @transform_0(%arg0: i32, %arg1: i32) -> (i32, i32) {
    %c0_i32 = arith.constant 0 : i32
    %c0_i32_0 = arith.constant 0 : i32
    return %arg0, %c0_i32 : i32, i32
  }
  func.func @transform_1(%arg0: i32, %arg1: i32) -> (i32, i32) {
    %c0_i32 = arith.constant 0 : i32
    %c0_i32_0 = arith.constant 0 : i32
    return %c0_i32, %arg1 : i32, i32
  }
  func.func @transform_2(%arg0: i32, %arg1: i32) -> (i32, i32) {
    %c0_i32 = arith.constant 0 : i32
    %c0_i32_0 = arith.constant 0 : i32
    return %c0_i32, %arg1 : i32, i32
  }
  func.func @transform_3(%arg0: i32, %arg1: i32) -> (i32, i32) {
    %c0_i32 = arith.constant 0 : i32
    return %arg0, %arg1 : i32, i32
  }
}

</mosaic_0001>

<llo_original>
// kernel: tpu_custom_call.1
$region0: #{tpu_custom_call.1}
  #allocation0 [shape = 'u32[]', space=smem, size = 0x4, offset = 0x4, fixed_abs, tag = 'smem constant byte address 0x4 - core index']
  #allocation1 [shape = 'u32[72,128]{1,0:T(1,128)}', space=vmem, size = 0x9000, scoped, tag = 'internal scratch']
  %s0 = inlined_call_operand.hbm [shape: f32[8,128], index: 0, kind: input, shape index: {}]
  %s1 = inlined_call_operand.hbm [shape: f32[128,256], index: 1, kind: input, shape index: {}]
  %s2 = inlined_call_operand.hbm [shape: f32[1,256], index: 2, kind: input, shape index: {}]
  %s3 = inlined_call_operand.hbm [shape: f32[8,256], index: 3, kind: output, shape index: {}]
  %s4 = sld [smem:[#allocation0]]
  $region57: #{tpu_custom_call.1} parent=0
    _
  %s6 = ssub.s32 1, %s4
  %s7 = scalar_select 0, %s6, %s4
  $region1: #{tpu_custom_call.1} parent=0
    #allocation2 [shape = 'u8[4096]{0}', space=vmem, size = 0x1000, scoped, tag = 'input window, operand 0, single buffered']
    #allocation3 [shape = 's32[2]{0}', space=sflag, size = 0x8, scoped, tag = 'scoped memory for tpu_custom_call.1']
    #allocation4 [shape = 's32[2]{0}', space=sflag, size = 0x8, scoped, tag = 'scoped memory for tpu_custom_call.1']
    #allocation5 [shape = 'u8[131072]{0}', space=vmem, size = 0x20000, scoped, tag = 'input window, operand 1']
    #allocation6 [shape = 's32[2]{0}', space=sflag, size = 0x8, scoped, tag = 'scoped memory for tpu_custom_call.1']
    #allocation7 [shape = 'u8[1024]{0}', space=vmem, size = 0x400, scoped, tag = 'input window, operand 2']
    #allocation8 [shape = 'u8[8192]{0}', space=vmem, size = 0x2000, scoped, tag = 'output window, operand 0']
    %8 = vsyncpa [#allocation3], 0
    %9 = vsyncpa [#allocation6], 0
    %s10 = scalar_lea.sflag [#allocation6], 1
    %11 = vsyncpa %s10, 0
    %12 = vsyncpa [#allocation4], 0
    %s13 = scalar_lea.sflag [#allocation4], 1
    %14 = vsyncpa %s13, 0
    loop: start=0, step=1, limit=4
    $region2: #{tpu_custom_call.1} parent=1 // loop_pre_header
      _
    $region3: #{tpu_custom_call.1} parent=1 // loop_header
      %s16 = sphi 0, %s20
      %p17 = scmp.ge.s32.totalorder %s16, 4
      %s23 = sphi 0, %s35
      %s24 = sphi 0, %s31
      %s25 = sphi 0, %s23
      %s26 = sphi 0, %s24
      %s27 = sphi 0, %s25
      %s28 = sphi 0, %s26
      %s38 = sphi 0, %s40
      %s41 = sphi 0, %s38
      %s42 = sphi 0, %s41
      %s58 = sphi 0, %s42
      %s64 = sphi 0, %s66
      %s67 = sphi 0, %s64
      %s68 = sphi 0, %s67
      %s84 = sphi 0, %s68
      %s90 = sphi 0, %s92
      %s93 = sphi 0, %s90
      %s94 = sphi 0, %s93
      %s110 = sphi 0, %s94
      %s118 = sphi 0, %s120
      %s121 = sphi 0, %s118
      %s122 = sphi 0, %s121
      %s138 = sphi 0, %s122
    $region4: #{tpu_custom_call.1} parent=1 // loop_header_branch
      %19 = sbr.rel (%p17) target = $region8
    $region5: #{tpu_custom_call.1} parent=1 // loop_body
      %s21 = ssub.s32 %s16, 1
      %s22 = ssub.s32 %s16, 2
      %s29 = sadd.s32 1, %s24
      %p30 = scmp.ge.s32.totalorder %s29, 2
      %s31 = scalar_select %p30, 0, %s29
      %s32 = sadd.s32 1, %s23
      %s33 = scalar_select %p30, %s32, %s23
      %p34 = scmp.ge.s32.totalorder %s33, 1
      %s35 = scalar_select %p34, 0, %s33
      %s36 = ssub.s32 %s23, %s35
      %p37 = scmp.eq.s32.totalorder %s36, 0
      %s39 = sadd.s32 %s38, 1
      %s40 = scalar_select %p37, %s38, %s39
      %p43 = pneg %p37
      %p44 = scmp.eq.s32.totalorder %s16, 1
      %p45 = por %p43, %p44
      %p46 = scmp.ne.s32.totalorder %s38, %s41
      %p47 = scmp.eq.s32.totalorder %s16, 0
      %p48 = por %p46, %p47
      %p49 = scmp.ne.s32.totalorder %s38, %s41
      %p50 = scmp.eq.s32.totalorder %s21, 1
      %p51 = por %p49, %p50
      %p52 = scmp.ne.s32.totalorder %s41, %s42
      %p53 = scmp.eq.s32.totalorder %s21, 0
      %p54 = por %p52, %p53
      %p55 = scmp.ne.s32.totalorder %s41, %s42
      %p56 = scmp.eq.s32.totalorder %s22, 1
      %p57 = por %p55, %p56
      %p59 = scmp.ne.s32.totalorder %s42, %s58
      %p60 = scmp.eq.s32.totalorder %s22, 0
      %p61 = por %p59, %p60
      %s62 = ssub.s32 %s24, %s31
      %p63 = scmp.eq.s32.totalorder %s62, 0
      %s65 = sadd.s32 %s64, 1
      %s66 = scalar_select %p63, %s64, %s65
      %p69 = pneg %p63
      %p70 = scmp.eq.s32.totalorder %s16, 1
      %p71 = por %p69, %p70
      %p72 = scmp.ne.s32.totalorder %s64, %s67
      %p73 = scmp.eq.s32.totalorder %s16, 0
      %p74 = por %p72, %p73
      %p75 = scmp.ne.s32.totalorder %s64, %s67
      %p76 = scmp.eq.s32.totalorder %s21, 1
      %p77 = por %p75, %p76
      %p78 = scmp.ne.s32.totalorder %s67, %s68
      %p79 = scmp.eq.s32.totalorder %s21, 0
      %p80 = por %p78, %p79
      %p81 = scmp.ne.s32.totalorder %s67, %s68
      %p82 = scmp.eq.s32.totalorder %s22, 1
      %p83 = por %p81, %p82
      %p85 = scmp.ne.s32.totalorder %s68, %s84
      %p86 = scmp.eq.s32.totalorder %s22, 0
      %p87 = por %p85, %p86
      %s88 = ssub.s32 %s24, %s31
      %p89 = scmp.eq.s32.totalorder %s88, 0
      %s91 = sadd.s32 %s90, 1
      %s92 = scalar_select %p89, %s90, %s91
      %p95 = pneg %p89
      %p96 = scmp.eq.s32.totalorder %s16, 1
      %p97 = por %p95, %p96
      %p98 = scmp.ne.s32.totalorder %s90, %s93
      %p99 = scmp.eq.s32.totalorder %s16, 0
      %p100 = por %p98, %p99
      %p101 = scmp.ne.s32.totalorder %s90, %s93
      %p102 = scmp.eq.s32.totalorder %s21, 1
      %p103 = por %p101, %p102
      %p104 = scmp.ne.s32.totalorder %s93, %s94
      %p105 = scmp.eq.s32.totalorder %s21, 0
      %p106 = por %p104, %p105
      %p107 = scmp.ne.s32.totalorder %s93, %s94
      %p108 = scmp.eq.s32.totalorder %s22, 1
      %p109 = por %p107, %p108
      %p111 = scmp.ne.s32.totalorder %s94, %s110
      %p112 = scmp.eq.s32.totalorder %s22, 0
      %p113 = por %p111, %p112
      %s114 = ssub.s32 %s23, %s35
      %s115 = ssub.s32 %s24, %s31
      %s116 = sor.u32 %s114, %s115
      %p117 = scmp.eq.s32.totalorder %s116, 0
      %s119 = sadd.s32 %s118, 1
      %s120 = scalar_select %p117, %s118, %s119
      %p123 = pneg %p117
      %p124 = scmp.eq.s32.totalorder %s16, 1
      %p125 = por %p123, %p124
      %p126 = scmp.ne.s32.totalorder %s118, %s121
      %p127 = scmp.eq.s32.totalorder %s16, 0
      %p128 = por %p126, %p127
      %p129 = scmp.ne.s32.totalorder %s118, %s121
      %p130 = scmp.eq.s32.totalorder %s21, 1
      %p131 = por %p129, %p130
      %p132 = scmp.ne.s32.totalorder %s121, %s122
      %p133 = scmp.eq.s32.totalorder %s21, 0
      %p134 = por %p132, %p133
      %p135 = scmp.ne.s32.totalorder %s121, %s122
      %p136 = scmp.eq.s32.totalorder %s22, 1
      %p137 = por %p135, %p136
      %p139 = scmp.ne.s32.totalorder %s122, %s138
      %p140 = scmp.eq.s32.totalorder %s22, 0
      %p141 = por %p139, %p140
      %p142 = scmp.le.s32.totalorder 1, %s16
      %p143 = scmp.lt.s32.totalorder %s16, 3
      %p144 = pnand %p142, %p143
      %p145 = pneg %p144
      // Predicated region
      $region9: #{tpu_custom_call.1} parent=5 // pred_check
        _
      $region10: #{tpu_custom_call.1} parent=5 // pred_check_branch
        %147 = sbr.rel (%p144) target = $region12
      $region11: #{tpu_custom_call.1} parent=5 // pred_region
        %s148 = ssub.s32 %s16, 1
        // Predicated region
        $region13: #{tpu_custom_call.1} parent=11 // pred_check
          %p149 = pneg %p54
        $region14: #{tpu_custom_call.1} parent=11 // pred_check_branch
          %151 = sbr.rel (%p149) target = $region16
        $region15: #{tpu_custom_call.1} parent=11 // pred_region
          %153 = vsyncadd [#allocation3], 0
          %s154 = smul.addr %s25, 8
          %s155 = scalar_lea.hbm %s0, %s154
          %s157 = sshll.u32 %s155, 4
          %s158 = int_to_ptr.hbm [resolvable:$true] %s157
          %s159 = sshll.u32 [#allocation2], 4
          %s160 = int_to_ptr.vmem [resolvable:$true] %s159
          %162 = dma.hbm_to_vmem [thread:$0]  %s158, 128, %s160, [#allocation3]
        $region16: #{tpu_custom_call.1} parent=11 // pred_fallthru
          _
      $region12: #{tpu_custom_call.1} parent=5 // pred_fallthru
        _
      %p163 = scmp.lt.s32.totalorder %s16, 2
      // Predicated region
      $region17: #{tpu_custom_call.1} parent=5 // pred_check
        %p164 = pneg %p163
      $region18: #{tpu_custom_call.1} parent=5 // pred_check_branch
        %166 = sbr.rel (%p164) target = $region20
      $region19: #{tpu_custom_call.1} parent=5 // pred_region
        // Predicated region
        $region21: #{tpu_custom_call.1} parent=19 // pred_check
          %p167 = pneg %p74
        $region22: #{tpu_custom_call.1} parent=19 // pred_check_branch
          %169 = sbr.rel (%p167) target = $region24
        $region23: #{tpu_custom_call.1} parent=19 // pred_region
          %s170 = sand.u32 %s16, 1
          %s171 = scalar_lea.sflag [#allocation6], %s170
          %s172 = sand.u32 %s64, 1
          %s173 = smul.addr %s172, 128
          %s174 = scalar_lea.vmem [#allocation5], %s173
          %176 = vsyncadd %s171, 0
          %s177 = smul.addr %s24, 8
          %s178 = scalar_lea.hbm %s1, %s177
          %s179 = sshll.u32 %s178, 4
          %s180 = int_to_ptr.hbm [resolvable:$true] %s179
          %s181 = sshll.u32 %s174, 4
          %s182 = int_to_ptr.vmem [resolvable:$true] %s181
          %187 = dma.hbm_to_vmem [thread:$0]  %s180, 2048, %s182, %s171, 256, 128, 8
        $region24: #{tpu_custom_call.1} parent=19 // pred_fallthru
          _
        // Predicated region
        $region25: #{tpu_custom_call.1} parent=19 // pred_check
          %p188 = pneg %p100
        $region26: #{tpu_custom_call.1} parent=19 // pred_check_branch
          %190 = sbr.rel (%p188) target = $region28
        $region27: #{tpu_custom_call.1} parent=19 // pred_region
          %s191 = sand.u32 %s16, 1
          %s192 = scalar_lea.sflag [#allocation6], %s191
          %s193 = sand.u32 %s90, 1
          %s194 = scalar_lea.vmem [#allocation7], %s193
          %196 = vsyncadd %s192, 0
          %s197 = scalar_lea.hbm %s2, %s24
          %s199 = sshll.u32 %s197, 4
          %s200 = int_to_ptr.hbm [resolvable:$true] %s199
          %s201 = sshll.u32 %s194, 4
          %s202 = int_to_ptr.vmem [resolvable:$true] %s201
          %204 = dma.hbm_to_vmem [thread:$0]  %s200, 16, %s202, %s192
        $region28: #{tpu_custom_call.1} parent=19 // pred_fallthru
          _
      $region20: #{tpu_custom_call.1} parent=5 // pred_fallthru
        _
      %p205 = scmp.le.s32.totalorder 1, %s16
      %p206 = scmp.lt.s32.totalorder %s16, 3
      %p207 = pnand %p205, %p206
      %p208 = pneg %p207
      // Predicated region
      $region29: #{tpu_custom_call.1} parent=5 // pred_check
        _
      $region30: #{tpu_custom_call.1} parent=5 // pred_check_branch
        %210 = sbr.rel (%p207) target = $region32
      $region31: #{tpu_custom_call.1} parent=5 // pred_region
        %s211 = ssub.s32 %s16, 1
        // Predicated region
        $region33: #{tpu_custom_call.1} parent=31 // pred_check
          %p212 = pneg %p54
        $region34: #{tpu_custom_call.1} parent=31 // pred_check_branch
          %214 = sbr.rel (%p212) target = $region36
        $region35: #{tpu_custom_call.1} parent=31 // pred_region
          %216 = dma.done [#allocation3], 128
        $region36: #{tpu_custom_call.1} parent=31 // pred_fallthru
          _
        %s217 = sand.u32 %s21, 1
        %s218 = scalar_lea.sflag [#allocation6], %s217
        %s219 = sand.u32 %s67, 1
        %s220 = smul.addr %s219, 128
        %s221 = scalar_lea.vmem [#allocation5], %s220
        // Predicated region
        $region37: #{tpu_custom_call.1} parent=31 // pred_check
          %p222 = pneg %p80
        $region38: #{tpu_custom_call.1} parent=31 // pred_check_branch
          %224 = sbr.rel (%p222) target = $region40
        $region39: #{tpu_custom_call.1} parent=31 // pred_region
          %226 = dma.done %s218, 2048
        $region40: #{tpu_custom_call.1} parent=31 // pred_fallthru
          _
        %s227 = sand.u32 %s21, 1
        %s228 = scalar_lea.sflag [#allocation6], %s227
        %s229 = sand.u32 %s93, 1
        %s230 = scalar_lea.vmem [#allocation7], %s229
        // Predicated region
        $region41: #{tpu_custom_call.1} parent=31 // pred_check
          %p231 = pneg %p106
        $region42: #{tpu_custom_call.1} parent=31 // pred_check_branch
          %233 = sbr.rel (%p231) target = $region44
        $region43: #{tpu_custom_call.1} parent=31 // pred_region
          %235 = dma.done %s228, 16
        $region44: #{tpu_custom_call.1} parent=31 // pred_fallthru
          _
        %p236 = pneg %p54
        %p237 = pneg %p51
        %s238 = sand.u32 %s21, 1
        %s239 = scalar_lea.sflag [#allocation6], %s238
        %s240 = sand.u32 %s67, 1
        %s241 = smul.addr %s240, 128
        %s242 = scalar_lea.vmem [#allocation5], %s241
        %p243 = pneg %p80
        %p244 = pneg %p77
        %s245 = sand.u32 %s21, 1
        %s246 = scalar_lea.sflag [#allocation6], %s245
        %s247 = sand.u32 %s93, 1
        %s248 = scalar_lea.vmem [#allocation7], %s247
        %p249 = pneg %p106
        %p250 = pneg %p103
        %p251 = pneg %p134
        %p252 = pneg %p131
        %s253 = sand.u32 %s121, 1
        %s254 = scalar_lea.sflag [#allocation4], %s253
        %s255 = sand.u32 %s121, 1
        %s256 = smul.addr %s255, 8
        %s257 = scalar_lea.vmem [#allocation8], %s256
        %v258 = vld [vmem:[#allocation2] sm:$0xff]
        %v259 = vld [vmem:[%s221] sm:$0xff]
        %v260 = vld [vmem:[%s221 + $0x8] sm:$0xff]
        %v261 = vld [vmem:[%s221 + $0x10] sm:$0xff]
        %v262 = vld [vmem:[%s221 + $0x18] sm:$0xff]
        %v263 = vld [vmem:[%s221 + $0x20] sm:$0xff]
        %v264 = vld [vmem:[%s221 + $0x28] sm:$0xff]
        %v265 = vld [vmem:[%s221 + $0x30] sm:$0xff]
        %v266 = vld [vmem:[%s221 + $0x38] sm:$0xff]
        %v267 = vld [vmem:[%s221 + $0x40] sm:$0xff]
        %v268 = vld [vmem:[%s221 + $0x48] sm:$0xff]
        %v269 = vld [vmem:[%s221 + $0x50] sm:$0xff]
        %v270 = vld [vmem:[%s221 + $0x58] sm:$0xff]
        %v271 = vld [vmem:[%s221 + $0x60] sm:$0xff]
        %v272 = vld [vmem:[%s221 + $0x68] sm:$0xff]
        %v273 = vld [vmem:[%s221 + $0x70] sm:$0xff]
        %v274 = vld [vmem:[%s221 + $0x78] sm:$0xff]
        %v275 = vld [vmem:[%s230] sm:$0x1]
        %v277 = vperm.slane %v275, 0
        %279 = vmatpush.msra.mxu0 %v274
        %280 = vmatpush.msra.mxu0 %v273
        %281 = vmatpush.msra.mxu0 %v272
        %282 = vmatpush.msra.mxu0 %v271
        %283 = vmatpush.msra.mxu0 %v270
        %284 = vmatpush.msra.mxu0 %v269
        %285 = vmatpush.msra.mxu0 %v268
        %286 = vmatpush.msra.mxu0 %v267
        %287 = vmatpush.msra.mxu0 %v266
        %288 = vmatpush.msra.mxu0 %v265
        %289 = vmatpush.msra.mxu0 %v264
        %290 = vmatpush.msra.mxu0 %v263
        %291 = vmatpush.msra.mxu0 %v262
        %292 = vmatpush.msra.mxu0 %v261
        %293 = vmatpush.msra.mxu0 %v260
        %294 = vmatpush.msra.mxu0 %v259
        %295 = vmatmul.f32.gmra.mxu0 %v258
        %v296 = vpop.f32.mrf.mxu0
        %v297 = vadd.f32 %v277, %v296
        %298 = vdwg.mxu0
        %v299 = vmax.f32 %v297, 0.0
        %300 = vst [vmem:[%s257] sm:$0xff] %v299
        %s301 = sand.u32 %s121, 1
        %s302 = scalar_lea.sflag [#allocation4], %s301
        %s303 = sand.u32 %s121, 1
        %s304 = smul.addr %s303, 8
        %s305 = scalar_lea.vmem [#allocation8], %s304
        // Predicated region
        $region45: #{tpu_custom_call.1} parent=31 // pred_check
          %p306 = pneg %p131
        $region46: #{tpu_custom_call.1} parent=31 // pred_check_branch
          %308 = sbr.rel (%p306) target = $region48
        $region47: #{tpu_custom_call.1} parent=31 // pred_region
          %310 = vsyncadd %s302, 0
          %s311 = smul.addr %s25, 2
          %s312 = sadd.s32 %s26, %s311
          %s313 = smul.addr %s312, 8
          %s314 = scalar_lea.hbm %s3, %s313
          %s316 = sshll.u32 %s305, 4
          %s317 = int_to_ptr.vmem [resolvable:$true] %s316
          %s318 = sshll.u32 %s314, 4
          %s319 = int_to_ptr.hbm [resolvable:$true] %s318
          %321 = dma.vmem_to_hbm [thread:$0]  %s317, 128, %s319, %s302
        $region48: #{tpu_custom_call.1} parent=31 // pred_fallthru
          _
      $region32: #{tpu_custom_call.1} parent=5 // pred_fallthru
        _
      %p322 = scmp.le.s32.totalorder 2, %s16
      // Predicated region
      $region49: #{tpu_custom_call.1} parent=5 // pred_check
        %p323 = pneg %p322
      $region50: #{tpu_custom_call.1} parent=5 // pred_check_branch
        %325 = sbr.rel (%p323) target = $region52
      $region51: #{tpu_custom_call.1} parent=5 // pred_region
        %s326 = ssub.s32 %s16, 2
        // Predicated region
        $region53: #{tpu_custom_call.1} parent=51 // pred_check
          %p327 = pneg %p137
        $region54: #{tpu_custom_call.1} parent=51 // pred_check_branch
          %329 = sbr.rel (%p327) target = $region56
        $region55: #{tpu_custom_call.1} parent=51 // pred_region
          %s330 = sand.u32 %s122, 1
          %s331 = scalar_lea.sflag [#allocation4], %s330
          %s332 = sand.u32 %s122, 1
          %s333 = smul.addr %s332, 8
          %s334 = scalar_lea.vmem [#allocation8], %s333
          %336 = dma.done %s331, 128
        $region56: #{tpu_custom_call.1} parent=51 // pred_fallthru
          _
      $region52: #{tpu_custom_call.1} parent=5 // pred_fallthru
        _
    $region6: #{tpu_custom_call.1} parent=1 // loop_footer
      %s20 = sadd.s32 1, %s16
    $region7: #{tpu_custom_call.1} parent=1 // loop_footer_branch
      %15 = sbr.rel target = $region3
    $region8: #{tpu_custom_call.1} parent=1 // loop_exit
      _
    %337 = vsyncpa [#allocation3], 1
    %s338 = scalar_lea.sflag [#allocation3], 1
    %339 = vsyncpa %s338, 1
    %340 = vsyncpa [#allocation6], 1
    %s341 = scalar_lea.sflag [#allocation6], 1
    %342 = vsyncpa %s341, 1
    %343 = vsyncpa [#allocation4], 1
    %s344 = scalar_lea.sflag [#allocation4], 1
    %345 = vsyncpa %s344, 1

</llo_original>
